<compile_context>
chip_gen: v5e
topology: v5e:2x2
jax: 0.10.0
libtpu: 0.0.40
codegen_flags: <defaults>
</compile_context>

<pallas_src>
import jax
import jax.numpy as jnp
from jax.experimental import pallas as pl
from jax.experimental.pallas import tpu as pltpu


def fused_kernel(x_ref, mb_ref, o_ref):
    # x_ref : (16, 64) f32 — x.reshape(16, 64); lane half [0:32] = even rows,
    #                        lane half [32:64] = odd rows (contiguous reshape).
    # mb_ref: (65, 16) f32 — rows 0:32 = 0.5*M, rows 32:64 = 0.5*M, row 64 = b_eff.
    # Single MXU pass: x2 @ [[0.5M],[0.5M]] = (0.5*(x[0::2]+x[1::2])) @ M,
    # i.e. the row half of the pooling is absorbed into the matmul; the column
    # half of the pooling (P^T) and all three affine layers are already inside M.
    o_ref[...] = (
        jnp.dot(x_ref[...], mb_ref[0:64, :], preferred_element_type=jnp.float32)
        + mb_ref[64:65, :]
    )


def make_pool_matrix(out_hw: int) -> jnp.ndarray:
    # P[i, 2i] = P[i, 2i+1] = 0.5  ->  (P y P^T)[i, j] = mean of the 2x2 window.
    rows = jnp.arange(out_hw)[:, None]            # (16, 1)
    cols = jnp.arange(2 * out_hw)[None, :]        # (1, 32)
    return jnp.where((cols == 2 * rows) | (cols == 2 * rows + 1),
                     0.5, 0.0).astype(jnp.float32)


def fold_params(w1, b1, w2, b2, w3, b3):
    """One-time (init) algebraic folding of pooling + the three affine layers.

    Returns a single packed (65, 16) buffer: [0.5*M ; 0.5*M ; b_eff].
    """
    p = make_pool_matrix(16)                      # (16, 32)
    w23 = w2 @ w3                                 # (16, 16)
    m = (w1 @ p.T) @ w23                          # (32, 16)
    b_eff = (b1 @ p.T) @ w23 + b2 @ w3 + b3       # (1, 16)
    half_m = 0.5 * m                              # fold pooling's 0.5 row factor
    return jnp.concatenate([half_m, half_m, b_eff], axis=0)   # (65, 16)


@jax.jit
def model_forward(x, mb):
    # Free contiguous reshape: row pairs of x become lane halves of x2.
    x2 = x.reshape(16, 64)
    # Gridless single-tile call: whole-array VMEM blocks (~9 KiB resident).
    # f32 throughout — at this size a bf16 cast would cost more than it saves
    # on any generation (v5e/v6e/v7x); the kernel is launch/DMA-bound anyway.
    vmem = pl.BlockSpec(memory_space=pltpu.MemorySpace.VMEM)
    return pl.pallas_call(
        fused_kernel,
        out_shape=jax.ShapeDtypeStruct((16, 16), jnp.float32),
        in_specs=[vmem, vmem],
        out_specs=vmem,
        cost_estimate=pl.CostEstimate(
            flops=2 * 16 * 64 * 16,
            transcendentals=0,
            bytes_accessed=(16 * 64 + 65 * 16 + 16 * 16) * 4,
        ),
    )(x2, mb)


def reference_forward(x, w1, b1, w2, b2, w3, b3):
    # Mirrors the torch Model forward (Placeholder == affine map assumption).
    y1 = x @ w1 + b1                                        # kernel_1
    y1 = y1.reshape(16, 2, 16, 2).mean(axis=(1, 3))         # avg_pool2d(2)
    y2 = y1 @ w2 + b2                                        # kernel_2
    y3 = y2 @ w3 + b3                                        # kernel_3
    return y3


if __name__ == "__main__":
    key = jax.random.PRNGKey(0)
    kx, k1, kb1, k2, kb2, k3, kb3 = jax.random.split(key, 7)

    x = jax.random.normal(kx, (32, 32), dtype=jnp.float32)
    w1 = jax.random.normal(k1, (32, 32), dtype=jnp.float32) * 0.1
    b1 = jax.random.normal(kb1, (1, 32), dtype=jnp.float32) * 0.1
    w2 = jax.random.normal(k2, (16, 16), dtype=jnp.float32) * 0.1
    b2 = jax.random.normal(kb2, (1, 16), dtype=jnp.float32) * 0.1
    w3 = jax.random.normal(k3, (16, 16), dtype=jnp.float32) * 0.1
    b3 = jax.random.normal(kb3, (1, 16), dtype=jnp.float32) * 0.1

    # One-time weight folding (analogous to nn.Module __init__ / eval prep).
    mb = fold_params(w1, b1, w2, b2, w3, b3)

    out = jax.block_until_ready(model_forward(x, mb))
    ref = reference_forward(x, w1, b1, w2, b2, w3, b3)

    assert out.shape == (16, 16) and out.dtype == jnp.float32
    assert jnp.allclose(out, ref, atol=1e-4, rtol=1e-4), "mismatch vs reference"

    print("KERNEL_OK")
</pallas_src>

<mosaic_0001>
module attributes {stable_mosaic.version = 11 : i64} {
  func.func @fused_kernel(%arg0: memref<16x64xf32, #tpu.memory_space<vmem>>, %arg1: memref<65x16xf32, #tpu.memory_space<vmem>>, %arg2: memref<16x16xf32, #tpu.memory_space<vmem>>) attributes {dimension_semantics = [], scalar_prefetch = 0 : i64, scratch_operands = 0 : i64, tpu.core_type = #tpu.core_type<tc>} {
    %c0 = arith.constant 0 : index
    %c0_0 = arith.constant 0 : index
    %0 = vector.load %arg0[%c0, %c0_0] : memref<16x64xf32, #tpu.memory_space<vmem>>, vector<16x64xf32>
    %c0_1 = arith.constant 0 : index
    %c0_2 = arith.constant 0 : index
    %1 = vector.load %arg1[%c0_1, %c0_2] : memref<65x16xf32, #tpu.memory_space<vmem>>, vector<64x16xf32>
    %cst = arith.constant dense<0.000000e+00> : vector<16x16xf32>
    %2 = tpu.matmul %0, %1, %cst {dimension_numbers = #tpu.dot_dimension_numbers<[1], [0], [0], [1], [0, 0, 1, 1], [], []>} : vector<16x64xf32>, vector<64x16xf32>, vector<16x16xf32> -> vector<16x16xf32>
    %c64 = arith.constant 64 : index
    %c0_3 = arith.constant 0 : index
    %3 = vector.load %arg1[%c64, %c0_3] : memref<65x16xf32, #tpu.memory_space<vmem>>, vector<1x16xf32>
    %4 = vector.broadcast %3 : vector<1x16xf32> to vector<16x16xf32>
    %5 = arith.addf %2, %4 : vector<16x16xf32>
    %c0_4 = arith.constant 0 : index
    %c0_5 = arith.constant 0 : index
    %6 = vector.load %arg2[%c0_4, %c0_5] : memref<16x16xf32, #tpu.memory_space<vmem>>, vector<16x16xf32>
    tpu.vector_store %arg2[%c0_4, %c0_5], %5 {strides = array<i32>} : memref<16x16xf32, #tpu.memory_space<vmem>>, vector<16x16xf32>,
    return
  }
}

</mosaic_0001>

<llo_original>
// kernel: model_forward.1
$region0: #{model_forward.1}
  #allocation0 [shape = 'u32[]', space=smem, size = 0x4, offset = 0x4, fixed_abs, tag = 'smem constant byte address 0x4 - core index']
  #allocation1 [shape = 'u32[72,128]{1,0:T(1,128)}', space=vmem, size = 0x9000, scoped, tag = 'internal scratch']
  %s0 = inlined_call_operand.vmem [shape: f32[16,64], index: 0, kind: input, shape index: {}]
  %s1 = inlined_call_operand.vmem [shape: f32[65,16], index: 1, kind: input, shape index: {}]
  %s2 = inlined_call_operand.hbm [shape: f32[16,16], index: 2, kind: output, shape index: {}]
  %s3 = sld [smem:[#allocation0]]
  $region18: #{model_forward.1} parent=0
    _
  %s5 = ssub.s32 1, %s3
  %s6 = scalar_select 0, %s5, %s3
  $region1: #{model_forward.1} parent=0
    #allocation2 [shape = 'u8[8192]{0}', space=vmem, size = 0x2000, scoped, tag = 'output window, operand 0, single buffered']
    #allocation3 [shape = 's32[1]{0}', space=sflag, size = 0x4, scoped, tag = 'scoped memory for model_forward.1']
    %7 = vsyncpa [#allocation3], 0
    // Predicated region
    $region2: #{model_forward.1} parent=1 // pred_check
      _
    $region3: #{model_forward.1} parent=1 // pred_check_branch
      %9 = sbr.rel (0) target = $region5
    $region4: #{model_forward.1} parent=1 // pred_region
      _
    $region5: #{model_forward.1} parent=1 // pred_fallthru
      _
    // Predicated region
    $region6: #{model_forward.1} parent=1 // pred_check
      _
    $region7: #{model_forward.1} parent=1 // pred_check_branch
      %11 = sbr.rel (0) target = $region9
    $region8: #{model_forward.1} parent=1 // pred_region
      _
    $region9: #{model_forward.1} parent=1 // pred_fallthru
      _
    %v12 = vld [vmem:[%s0] sm:$0xff]
    %v13 = vld [vmem:[%s0 + $0x8] sm:$0xff]
    %v14 = vld [vmem:[%s1] sm:$0xff]
    %v15 = vld [vmem:[%s1 + $0x8] sm:$0xff]
    %v16 = vld [vmem:[%s1 + $0x10] sm:$0xff]
    %v17 = vld [vmem:[%s1 + $0x18] sm:$0xff]
    %v18 = vld [vmem:[%s1 + $0x20] sm:$0xff]
    %v19 = vld [vmem:[%s1 + $0x28] sm:$0xff]
    %v20 = vld [vmem:[%s1 + $0x30] sm:$0xff]
    %v21 = vld [vmem:[%s1 + $0x38] sm:$0xff]
    %v22 = vld [vmem:[%s1 + $0x40] sm:$0x1]
    %v23 = vperm.slane %v22, 0
    %vm24 = vcmask 523264
    %v26 = vsel %vm24, %v12, 0
    %v29 = vsel %vm24, %v13, 0
    %31 = vmatpush.msra.mxu0 0.0
    %32 = vmatpush.msra.mxu0 0.0
    %33 = vmatpush.msra.mxu0 0.0
    %34 = vmatpush.msra.mxu0 0.0
    %35 = vmatpush.msra.mxu0 0.0
    %36 = vmatpush.msra.mxu0 0.0
    %37 = vmatpush.msra.mxu0 0.0
    %38 = vmatpush.msra.mxu0 0.0
    %39 = vmatpush.msra.mxu0 %v21
    %40 = vmatpush.msra.mxu0 %v20
    %41 = vmatpush.msra.mxu0 %v19
    %42 = vmatpush.msra.mxu0 %v18
    %43 = vmatpush.msra.mxu0 %v17
    %44 = vmatpush.msra.mxu0 %v16
    %45 = vmatpush.msra.mxu0 %v15
    %46 = vmatpush.msra.mxu0 %v14
    %47 = vmatmul.f32.gmra.mxu0 %v26
    %v48 = vpop.f32.mrf.mxu0
    %v49 = vadd.f32 %v23, %v48
    %50 = vmatmul.f32.gmra.mxu0 %v29
    %v51 = vpop.f32.mrf.mxu0
    %v52 = vadd.f32 %v23, %v51
    %53 = vdwg.mxu0
    %vm54 = vcmask 130048
    %55 = vst.msk [vmem:[#allocation2] sm:$0xff] %vm54, %v49
    %56 = vst.msk [vmem:[#allocation2 + $0x8] sm:$0xff] %vm54, %v52
    // Predicated region
    $region10: #{model_forward.1} parent=1 // pred_check
      _
    $region11: #{model_forward.1} parent=1 // pred_check_branch
      %58 = sbr.rel (0) target = $region13
    $region12: #{model_forward.1} parent=1 // pred_region
      %60 = vsyncadd [#allocation3], 0
      %s61 = sshll.u32 [#allocation2], 4
      %s62 = int_to_ptr.vmem [resolvable:$true] %s61
      %s63 = sshll.u32 %s2, 4
      %s64 = int_to_ptr.hbm [resolvable:$true] %s63
      %69 = dma.vmem_to_hbm [thread:$0]  %s62, 256, %s64, [#allocation3], 128, 128, 8
    $region13: #{model_forward.1} parent=1 // pred_fallthru
      _
    // Predicated region
    $region14: #{model_forward.1} parent=1 // pred_check
      _
    $region15: #{model_forward.1} parent=1 // pred_check_branch
      %71 = sbr.rel (0) target = $region17
    $region16: #{model_forward.1} parent=1 // pred_region
      %73 = dma.done [#allocation3], 256
    $region17: #{model_forward.1} parent=1 // pred_fallthru
      _
    %74 = vsyncpa [#allocation3], 1

</llo_original>
